<compile_context>
chip_gen: v5e
topology: v5e:2x2
jax: 0.10.0
libtpu: 0.0.40
codegen_flags: <defaults>
</compile_context>

<pallas_src>
import functools

import jax
import jax.numpy as jnp
from jax.experimental import pallas as pl
from jax.experimental.pallas import tpu as pltpu


def _round_up(a: int, b: int) -> int:
    return ((a + b - 1) // b) * b


def _pick_tile(dim: int, align: int, max_tile: int, max_waste: float = 0.125) -> int:
    """Largest tile (power-of-two multiple of `align`, <= max_tile) whose
    zero-padding waste for `dim` stays below `max_waste`."""
    dim_aligned = _round_up(dim, align)
    if dim_aligned <= align:
        return align
    best = align
    t = align
    while t * 2 <= min(max_tile, dim_aligned):
        t *= 2
        padded = _round_up(dim, t)
        if (padded - dim) / dim <= max_waste:
            best = t
    return best


def _spiking_kernel_single_k(x_ref, wt_ref, spike_ref, *, threshold):
    """Single K block: fused MXU matmul + threshold compare. No accumulator
    scratch, no pl.when -> no redundant VMEM store/load traffic."""
    ws = jnp.dot(x_ref[...], wt_ref[...], preferred_element_type=jnp.float32)
    spike_ref[...] = (ws >= threshold).astype(spike_ref.dtype)


def _spiking_kernel_multi_k(x_ref, wt_ref, spike_ref, acc_ref, *, threshold):
    """General path: 3-D grid, K (axis 2) is the reduction."""
    k = pl.program_id(2)
    prod = jnp.dot(x_ref[...], wt_ref[...], preferred_element_type=jnp.float32)

    @pl.when(k == 0)
    def _():
        # First K step stores directly: no zeros-tile write + readback.
        acc_ref[...] = prod

    @pl.when(k != 0)
    def _():
        acc_ref[...] += prod

    @pl.when(k == pl.num_programs(2) - 1)
    def _():
        # membrane = 0 + ws; spike = (membrane >= threshold).float()
        spike_ref[...] = (acc_ref[...] >= threshold).astype(spike_ref.dtype)


def spiking_layer(
    x,
    weight=None,
    threshold=1.0,
    reset_value=0.0,  # API parity; never affects the returned spikes
    *,
    weight_t=None,          # optional pre-transposed (in_dim, out_dim) weight
    block_m=None,
    block_n=None,
    block_k=None,
    compute_dtype=jnp.float32,  # jnp.bfloat16: faster MXU / half input DMA, but spikes
                                # within bf16 rounding of threshold may flip vs f32
    out_dtype=jnp.float32,      # spikes are exactly 0/1; bf16 halves output writeback
):
    """x: (B, in_dim), weight: (out_dim, in_dim) -> (B, out_dim) spikes."""
    del reset_value  # only touches internal state the PyTorch forward never returns

    B, in_dim = x.shape
    if weight_t is not None:
        in_dim_w, out_dim = weight_t.shape
        wt = weight_t
    else:
        assert weight is not None, "pass `weight` or pre-transposed `weight_t`"
        out_dim, in_dim_w = weight.shape
        wt = weight.T  # hoist this (use weight_t=) if called in a tight loop
    assert in_dim == in_dim_w, "weight inner dim must match x feature dim"

    # --- generation-aware VMEM budget / tile ceilings -----------------------
    try:
        vmem_cap = int(pltpu.get_tpu_info().vmem_capacity_bytes)
    except Exception:
        vmem_cap = 64 * 1024 * 1024  # conservative (v7x-sized) fallback
    big_vmem = vmem_cap >= (100 << 20)          # v5e/v6e: 128 MiB; v7x: 64 MiB
    vmem_limit = int(min((vmem_cap * 3) // 4, 96 << 20))

    max_tm = 512
    max_tn = 1024 if big_vmem else 512
    max_tk = 512

    tm = block_m if block_m is not None else _pick_tile(B, 8, max_tm)
    tn = block_n if block_n is not None else _pick_tile(out_dim, 128, max_tn)
    tk = block_k if block_k is not None else _pick_tile(in_dim, 128, max_tk)

    # Megacore (v7x): ensure >= 2 blocks on the parallel M axis when there is
    # enough batch to split, so both TensorCores get work.
    if block_m is None and B >= 16:
        while _round_up(B, tm) // tm < 2 and tm >= 16:
            tm //= 2

    Mp = _round_up(B, tm)
    Np = _round_up(out_dim, tn)
    Kp = _round_up(in_dim, tk)

    # Zero-pad to tile multiples. K-padding with zeros is exact; padded M/N
    # rows/cols are sliced off below. Output last dim is a multiple of 128
    # -> unmasked, lane-dense vector stores.
    xp = x
    if (Mp, Kp) != (B, in_dim):
        xp = jnp.pad(x, ((0, Mp - B), (0, Kp - in_dim)))
    if wt.shape != (Kp, Np):
        wt = jnp.pad(wt, ((0, Kp - wt.shape[0]), (0, Np - wt.shape[1])))

    if xp.dtype != compute_dtype:
        xp = xp.astype(compute_dtype)
    if wt.dtype != compute_dtype:
        wt = wt.astype(compute_dtype)

    m_blocks, n_blocks, k_blocks = Mp // tm, Np // tn, Kp // tk
    in_itemsize = jnp.dtype(compute_dtype).itemsize
    out_itemsize = jnp.dtype(out_dtype).itemsize
    cost = pl.CostEstimate(
        flops=2 * Mp * Np * Kp,
        transcendentals=0,
        # Count grid revisits: each x strip is re-read per N block, each wt
        # strip per M block.
        bytes_accessed=(Mp * Kp * in_itemsize) * n_blocks
        + (Kp * Np * in_itemsize) * m_blocks
        + Mp * Np * out_itemsize,
    )

    if k_blocks == 1:
        # Fused single-K path (the common spiking-layer case: in_dim <= tk).
        kernel = functools.partial(_spiking_kernel_single_k, threshold=float(threshold))
        grid_spec = pltpu.PrefetchScalarGridSpec(
            num_scalar_prefetch=0,
            grid=(m_blocks, n_blocks),
            in_specs=[
                pl.BlockSpec((tm, Kp), lambda i, j: (i, 0)),
                pl.BlockSpec((Kp, tn), lambda i, j: (0, j)),
            ],
            out_specs=pl.BlockSpec((tm, tn), lambda i, j: (i, j)),
            scratch_shapes=[],
        )
        dims = ("parallel", "parallel")
    else:
        kernel = functools.partial(_spiking_kernel_multi_k, threshold=float(threshold))
        grid_spec = pltpu.PrefetchScalarGridSpec(
            num_scalar_prefetch=0,
            grid=(m_blocks, n_blocks, k_blocks),
            in_specs=[
                pl.BlockSpec((tm, tk), lambda i, j, k: (i, k)),
                pl.BlockSpec((tk, tn), lambda i, j, k: (k, j)),
            ],
            out_specs=pl.BlockSpec((tm, tn), lambda i, j, k: (i, j)),
            scratch_shapes=[pltpu.VMEM((tm, tn), jnp.float32)],
        )
        dims = ("parallel", "parallel", "arbitrary")

    out_padded = pl.pallas_call(
        kernel,
        out_shape=jax.ShapeDtypeStruct((Mp, Np), out_dtype),
        grid_spec=grid_spec,
        compiler_params=pltpu.CompilerParams(
            dimension_semantics=dims,
            vmem_limit_bytes=vmem_limit,
        ),
        cost_estimate=cost,
    )(xp, wt)

    return out_padded[:B, :out_dim]


if __name__ == "__main__":
    # Shapes from the PyTorch script: input_size=2, output_size=1.
    input_size, output_size, batch = 2, 1, 8

    key = jax.random.PRNGKey(0)
    kx, kw, kx2, kw2 = jax.random.split(key, 4)

    weight = jax.random.normal(kw, (output_size, input_size), dtype=jnp.float32)
    x = jax.random.normal(kx, (batch, input_size), dtype=jnp.float32)

    spikes = jax.block_until_ready(spiking_layer(x, weight, threshold=1.0))
    ref = (x @ weight.T >= 1.0).astype(jnp.float32)
    assert spikes.shape == (batch, output_size)
    assert bool(jnp.all(spikes == ref)), "mismatch vs reference (single-K path)"

    # Second check: shapes forcing a multi-block 3-D grid (exercises the
    # accumulator path: first-K store, K reduction across blocks, padding).
    B2, IN2, OUT2 = 320, 384, 256
    x2 = jax.random.normal(kx2, (B2, IN2), dtype=jnp.float32)
    w2 = jax.random.normal(kw2, (OUT2, IN2), dtype=jnp.float32) * 0.05
    spikes2 = jax.block_until_ready(
        spiking_layer(x2, w2, threshold=1.0, block_m=128, block_n=128, block_k=128)
    )
    ws_ref = x2 @ w2.T
    ref2 = (ws_ref >= 1.0).astype(jnp.float32)
    # Ignore elements within fp-rounding of the threshold (summation order
    # differs between tilings).
    decided = jnp.abs(ws_ref - 1.0) > 1e-3
    assert spikes2.shape == (B2, OUT2)
    assert bool(jnp.all(jnp.where(decided, spikes2 == ref2, True))), (
        "mismatch vs reference (tiled shapes)"
    )

    print("KERNEL_OK")
</pallas_src>

<mosaic_0001>
module attributes {stable_mosaic.version = 11 : i64} {
  func.func @_spiking_kernel_single_k(%arg0: i32, %arg1: i32, %arg2: memref<8x128xf32, #tpu.memory_space<vmem>>, %arg3: memref<128x128xf32, #tpu.memory_space<vmem>>, %arg4: memref<8x128xf32, #tpu.memory_space<vmem>>) attributes {dimension_semantics = [#tpu.dimension_semantics<parallel>, #tpu.dimension_semantics<parallel>], iteration_bounds = array<i64: 1, 1>, scalar_prefetch = 0 : i64, scratch_operands = 0 : i64, tpu.core_type = #tpu.core_type<tc>, window_params = [{transform_indices = @transform_0, window_bounds = array<i64: 8, 128>}, {transform_indices = @transform_1, window_bounds = array<i64: 128, 128>}, {transform_indices = @transform_2, window_bounds = array<i64: 8, 128>}]} {
    %c0 = arith.constant 0 : index
    %c0_0 = arith.constant 0 : index
    %0 = vector.load %arg2[%c0, %c0_0] : memref<8x128xf32, #tpu.memory_space<vmem>>, vector<8x128xf32>
    %c0_1 = arith.constant 0 : index
    %c0_2 = arith.constant 0 : index
    %1 = vector.load %arg3[%c0_1, %c0_2] : memref<128x128xf32, #tpu.memory_space<vmem>>, vector<128x128xf32>
    %cst = arith.constant dense<0.000000e+00> : vector<8x128xf32>
    %2 = tpu.matmul %0, %1, %cst {dimension_numbers = #tpu.dot_dimension_numbers<[1], [0], [0], [1], [0, 0, 1, 1], [], []>} : vector<8x128xf32>, vector<128x128xf32>, vector<8x128xf32> -> vector<8x128xf32>
    %cst_3 = arith.constant 1.000000e+00 : f32
    %3 = vector.broadcast %cst_3 : f32 to vector<8x128xf32>
    %4 = arith.cmpf oge, %2, %3 : vector<8x128xf32>
    %5 = arith.extui %4 : vector<8x128xi1> to vector<8x128xi32>
    %6 = arith.sitofp %5 : vector<8x128xi32> to vector<8x128xf32>
    %c0_4 = arith.constant 0 : index
    %c0_5 = arith.constant 0 : index
    %7 = vector.load %arg4[%c0_4, %c0_5] : memref<8x128xf32, #tpu.memory_space<vmem>>, vector<8x128xf32>
    tpu.vector_store %arg4[%c0_4, %c0_5], %6 {strides = array<i32>} : memref<8x128xf32, #tpu.memory_space<vmem>>, vector<8x128xf32>,
    return
  }
  func.func @transform_0(%arg0: i32, %arg1: i32) -> (i32, i32) {
    %c0_i32 = arith.constant 0 : i32
    %c0_i32_0 = arith.constant 0 : i32
    return %arg0, %c0_i32 : i32, i32
  }
  func.func @transform_1(%arg0: i32, %arg1: i32) -> (i32, i32) {
    %c0_i32 = arith.constant 0 : i32
    %c0_i32_0 = arith.constant 0 : i32
    return %c0_i32, %arg1 : i32, i32
  }
  func.func @transform_2(%arg0: i32, %arg1: i32) -> (i32, i32) {
    %c0_i32 = arith.constant 0 : i32
    return %arg0, %arg1 : i32, i32
  }
}

</mosaic_0001>

<llo_original>
// kernel: tpu_custom_call.1
$region0: #{tpu_custom_call.1}
  #allocation0 [shape = 'u32[]', space=smem, size = 0x4, offset = 0x4, fixed_abs, tag = 'smem constant byte address 0x4 - core index']
  #allocation1 [shape = 'u32[72,128]{1,0:T(1,128)}', space=vmem, size = 0x9000, scoped, tag = 'internal scratch']
  %s0 = inlined_call_operand.hbm [shape: f32[8,128], index: 0, kind: input, shape index: {}]
  %s1 = inlined_call_operand.hbm [shape: f32[128,128], index: 1, kind: input, shape index: {}]
  %s2 = inlined_call_operand.hbm [shape: f32[8,128], index: 2, kind: output, shape index: {}]
  %s3 = sld [smem:[#allocation0]]
  $region26: #{tpu_custom_call.1} parent=0
    _
  %s5 = ssub.s32 1, %s3
  %s6 = scalar_select 0, %s5, %s3
  $region1: #{tpu_custom_call.1} parent=0
    #allocation2 [shape = 'u8[4096]{0}', space=vmem, size = 0x1000, scoped, tag = 'input window, operand 0, single buffered']
    #allocation3 [shape = 's32[1]{0}', space=sflag, size = 0x4, scoped, tag = 'scoped memory for tpu_custom_call.1']
    #allocation4 [shape = 's32[1]{0}', space=sflag, size = 0x4, scoped, tag = 'scoped memory for tpu_custom_call.1']
    #allocation5 [shape = 'u8[65536]{0}', space=vmem, size = 0x10000, scoped, tag = 'input window, operand 1, single buffered']
    #allocation6 [shape = 's32[1]{0}', space=sflag, size = 0x4, scoped, tag = 'scoped memory for tpu_custom_call.1']
    #allocation7 [shape = 'u8[4096]{0}', space=vmem, size = 0x1000, scoped, tag = 'output window, operand 0, single buffered']
    %7 = vsyncpa [#allocation3], 0
    %8 = vsyncpa [#allocation6], 0
    %9 = vsyncpa [#allocation4], 0
    // Predicated region
    $region2: #{tpu_custom_call.1} parent=1 // pred_check
      _
    $region3: #{tpu_custom_call.1} parent=1 // pred_check_branch
      %11 = sbr.rel (0) target = $region5
    $region4: #{tpu_custom_call.1} parent=1 // pred_region
      %13 = vsyncadd [#allocation3], 0
      %s15 = sshll.u32 %s0, 4
      %s16 = int_to_ptr.hbm [resolvable:$true] %s15
      %s17 = sshll.u32 [#allocation2], 4
      %s18 = int_to_ptr.vmem [resolvable:$true] %s17
      %20 = dma.hbm_to_vmem [thread:$0]  %s16, 128, %s18, [#allocation3]
    $region5: #{tpu_custom_call.1} parent=1 // pred_fallthru
      _
    // Predicated region
    $region6: #{tpu_custom_call.1} parent=1 // pred_check
      _
    $region7: #{tpu_custom_call.1} parent=1 // pred_check_branch
      %22 = sbr.rel (0) target = $region9
    $region8: #{tpu_custom_call.1} parent=1 // pred_region
      %24 = vsyncadd [#allocation6], 0
      %s25 = sshll.u32 %s1, 4
      %s26 = int_to_ptr.hbm [resolvable:$true] %s25
      %s27 = sshll.u32 [#allocation5], 4
      %s28 = int_to_ptr.vmem [resolvable:$true] %s27
      %33 = dma.hbm_to_vmem [thread:$0]  %s26, 2048, %s28, [#allocation6], 128, 128, 8
    $region9: #{tpu_custom_call.1} parent=1 // pred_fallthru
      _
    // Predicated region
    $region10: #{tpu_custom_call.1} parent=1 // pred_check
      _
    $region11: #{tpu_custom_call.1} parent=1 // pred_check_branch
      %35 = sbr.rel (0) target = $region13
    $region12: #{tpu_custom_call.1} parent=1 // pred_region
      %37 = dma.done [#allocation3], 128
    $region13: #{tpu_custom_call.1} parent=1 // pred_fallthru
      _
    // Predicated region
    $region14: #{tpu_custom_call.1} parent=1 // pred_check
      _
    $region15: #{tpu_custom_call.1} parent=1 // pred_check_branch
      %39 = sbr.rel (0) target = $region17
    $region16: #{tpu_custom_call.1} parent=1 // pred_region
      %41 = dma.done [#allocation6], 2048
    $region17: #{tpu_custom_call.1} parent=1 // pred_fallthru
      _
    %v42 = vld [vmem:[#allocation2] sm:$0xff]
    %v43 = vld [vmem:[#allocation5] sm:$0xff]
    %v44 = vld [vmem:[#allocation5 + $0x8] sm:$0xff]
    %v45 = vld [vmem:[#allocation5 + $0x10] sm:$0xff]
    %v46 = vld [vmem:[#allocation5 + $0x18] sm:$0xff]
    %v47 = vld [vmem:[#allocation5 + $0x20] sm:$0xff]
    %v48 = vld [vmem:[#allocation5 + $0x28] sm:$0xff]
    %v49 = vld [vmem:[#allocation5 + $0x30] sm:$0xff]
    %v50 = vld [vmem:[#allocation5 + $0x38] sm:$0xff]
    %v51 = vld [vmem:[#allocation5 + $0x40] sm:$0xff]
    %v52 = vld [vmem:[#allocation5 + $0x48] sm:$0xff]
    %v53 = vld [vmem:[#allocation5 + $0x50] sm:$0xff]
    %v54 = vld [vmem:[#allocation5 + $0x58] sm:$0xff]
    %v55 = vld [vmem:[#allocation5 + $0x60] sm:$0xff]
    %v56 = vld [vmem:[#allocation5 + $0x68] sm:$0xff]
    %v57 = vld [vmem:[#allocation5 + $0x70] sm:$0xff]
    %v58 = vld [vmem:[#allocation5 + $0x78] sm:$0xff]
    %59 = vmatpush.msra.mxu0 %v58
    %60 = vmatpush.msra.mxu0 %v57
    %61 = vmatpush.msra.mxu0 %v56
    %62 = vmatpush.msra.mxu0 %v55
    %63 = vmatpush.msra.mxu0 %v54
    %64 = vmatpush.msra.mxu0 %v53
    %65 = vmatpush.msra.mxu0 %v52
    %66 = vmatpush.msra.mxu0 %v51
    %67 = vmatpush.msra.mxu0 %v50
    %68 = vmatpush.msra.mxu0 %v49
    %69 = vmatpush.msra.mxu0 %v48
    %70 = vmatpush.msra.mxu0 %v47
    %71 = vmatpush.msra.mxu0 %v46
    %72 = vmatpush.msra.mxu0 %v45
    %73 = vmatpush.msra.mxu0 %v44
    %74 = vmatpush.msra.mxu0 %v43
    %75 = vmatmul.f32.gmra.mxu0 %v42
    %v76 = vpop.f32.mrf.mxu0
    %v77 = vadd.f32 0.0, %v76
    %78 = vdwg.mxu0
    %vm79 = vcmp.ge.f32.partialorder %v77, 1.0
    %v80 = vsel %vm79, 1, 0
    %v81 = vcvt.s32.f32 %v80
    %82 = vst [vmem:[#allocation7] sm:$0xff] %v81
    // Predicated region
    $region18: #{tpu_custom_call.1} parent=1 // pred_check
      _
    $region19: #{tpu_custom_call.1} parent=1 // pred_check_branch
      %84 = sbr.rel (0) target = $region21
    $region20: #{tpu_custom_call.1} parent=1 // pred_region
      %86 = vsyncadd [#allocation4], 0
      %s88 = sshll.u32 [#allocation7], 4
      %s89 = int_to_ptr.vmem [resolvable:$true] %s88
      %s90 = sshll.u32 %s2, 4
      %s91 = int_to_ptr.hbm [resolvable:$true] %s90
      %93 = dma.vmem_to_hbm [thread:$0]  %s89, 128, %s91, [#allocation4]
    $region21: #{tpu_custom_call.1} parent=1 // pred_fallthru
      _
    // Predicated region
    $region22: #{tpu_custom_call.1} parent=1 // pred_check
      _
    $region23: #{tpu_custom_call.1} parent=1 // pred_check_branch
      %95 = sbr.rel (0) target = $region25
    $region24: #{tpu_custom_call.1} parent=1 // pred_region
      %97 = dma.done [#allocation4], 128
    $region25: #{tpu_custom_call.1} parent=1 // pred_fallthru
      _
    %98 = vsyncpa [#allocation3], 1
    %99 = vsyncpa [#allocation6], 1
    %100 = vsyncpa [#allocation4], 1

</llo_original>
